<compile_context>
chip_gen: v7x
topology: tpu7x:2x2x1
jax: 0.10.0
libtpu: 0.0.40
codegen_flags: <defaults>
</compile_context>

<pallas_src>
import functools

import jax
import jax.numpy as jnp
from jax.experimental import pallas as pl
from jax.experimental.pallas import tpu as pltpu

# Small, lane-friendly sizes consistent with the module's forward.
B, T = 2, 8            # batch, temporal length
D_IN = 32              # per-stream visual feature dim
HID = 32               # VisualHead hidden size
VOCAB = 128            # len(gloss_tokenizer)

NUM_HEADS = 4                     # left, right, fuse, body
HID_PACK = NUM_HEADS * HID        # 128  (hidden lanes, all heads packed)
V_PACK = NUM_HEADS * VOCAB        # 512  (vocab lanes, all heads packed)
SINGLE_STEP_ROWS = 256            # below this: one grid step (overhead dominated anyway)
MAX_TILE_ROWS = 512               # rows per grid step for large inputs (~85% HBM roofline)
LN_EPS = 1e-6

HEAD_ORDER = ("left", "right", "fuse", "body")


# ---------------------------------------------------------------------------
# Pallas kernel: all four heads + ensemble, one tile of token rows
# ---------------------------------------------------------------------------
def _fused_heads_kernel(xl_ref, xr_ref, xf_ref, xb_ref,
                        w1_ref, b1_ref, g_ref, be_ref, w2_ref, b2_ref, seg_ref,
                        logits_ref, lse_ref, ens_ref):
    rows = logits_ref.shape[0]

    # --- fc1 -------------------------------------------------------------
    # Four K=D_IN bf16 dots against row-slices of the block-diagonal W1.  Since W1
    # is block-diagonal, each stream only feeds its own head's hidden columns, so
    # the accumulated sum equals [x_l | x_r | x_f | x_b] @ W1_bd (one lane-dense
    # (rows, 128) slab).  Feeding the streams separately removes the wrapper-side
    # (n, 128) concat round trip through HBM.
    acc = None
    for hix, x_ref in enumerate((xl_ref, xr_ref, xf_ref, xb_ref)):
        xs = x_ref[...].astype(jnp.bfloat16)                      # bf16 MXU inputs
        w_rows = w1_ref[hix * D_IN:(hix + 1) * D_IN, :]           # static slice (bf16)
        part = jnp.dot(xs, w_rows, preferred_element_type=jnp.float32)
        acc = part if acc is None else acc + part
    h = acc + b1_ref[...]                                         # (rows, HID_PACK) f32

    # --- per-head LayerNorm ------------------------------------------------
    # Segmented E[h] and E[h^2] via two independent f32 matmuls against the hoisted
    # block-averaging matrix (both in flight on the MXU together), then
    # var = E[h^2] - mu^2, clamped >= 0 against f32 cancellation.
    seg = seg_ref[...]
    mu = jnp.dot(h, seg, preferred_element_type=jnp.float32)
    ex2 = jnp.dot(h * h, seg, preferred_element_type=jnp.float32)
    var = jnp.maximum(ex2 - mu * mu, 0.0)
    hn = (h - mu) * jax.lax.rsqrt(var + LN_EPS) * g_ref[...] + be_ref[...]
    a = jnp.maximum(hn, 0.0)                                      # ReLU after the norm

    # --- fc2 ---------------------------------------------------------------
    # Block-diagonal HID_PACK -> V_PACK, bf16 inputs / f32 accumulation; one
    # unmasked 512-lane store of the packed logits slab.
    logits = jnp.dot(a.astype(jnp.bfloat16), w2_ref[...],
                     preferred_element_type=jnp.float32) + b2_ref[...]
    logits_ref[...] = logits

    # --- softmax statistics --------------------------------------------------
    # Per-head max / exp-sum over each VOCAB-wide, 128-lane-aligned segment.  Only
    # the tiny per-head logsumexp and the 128-lane ensemble leave the kernel; the
    # (rows, 512) log-softmax slab is reconstructed outside as logits - lse
    # (bit-identical), removing ~40% of this kernel's HBM write traffic.
    head_lane = jax.lax.broadcasted_iota(jnp.int32, (rows, NUM_HEADS), 1)
    lse_slab = jnp.zeros((rows, NUM_HEADS), jnp.float32)
    prob_sum = jnp.zeros((rows, VOCAB), jnp.float32)
    for hix in range(NUM_HEADS):
        sl = logits[:, hix * VOCAB:(hix + 1) * VOCAB]             # aligned 128-lane slice
        m = jnp.max(sl, axis=-1, keepdims=True)
        e = jnp.exp(sl - m)
        s = jnp.sum(e, axis=-1, keepdims=True)
        lse_slab = jnp.where(head_lane == hix, m + jnp.log(s), lse_slab)
        # EUP approx reciprocal keeps the divide off the VALU path.
        prob_sum = prob_sum + e * pl.reciprocal(s, approx=True)
    lse_ref[...] = lse_slab                                       # (rows, NUM_HEADS)
    ens_ref[...] = jnp.log(prob_sum)                              # (rows, VOCAB)


# ---------------------------------------------------------------------------
# Parameter packing / init
# ---------------------------------------------------------------------------
def _round_up(a, b):
    return ((a + b - 1) // b) * b


def _block_diag(blocks):
    r = sum(blk.shape[0] for blk in blocks)
    c = sum(blk.shape[1] for blk in blocks)
    out = jnp.zeros((r, c), blocks[0].dtype)
    ro = co = 0
    for blk in blocks:
        out = out.at[ro:ro + blk.shape[0], co:co + blk.shape[1]].set(blk)
        ro += blk.shape[0]
        co += blk.shape[1]
    return out


def pack_recognition_head_params(params):
    """Block-diagonal bf16 weight slabs, concatenated f32 vectors, and the hoisted
    segmented-LayerNorm block-averaging matrix (built once, not per grid step)."""
    cat = lambda key: jnp.concatenate([params[nm][key] for nm in HEAD_ORDER], axis=-1)
    seg_id = jnp.arange(HID_PACK, dtype=jnp.int32) // HID
    seg_avg = (seg_id[:, None] == seg_id[None, :]).astype(jnp.float32) / HID
    return {
        "w1_bd": _block_diag([params[nm]["w1"] for nm in HEAD_ORDER]).astype(jnp.bfloat16),
        "b1": cat("b1"),
        "gamma": cat("gamma"),
        "beta": cat("beta"),
        "w2_bd": _block_diag([params[nm]["w2"] for nm in HEAD_ORDER]).astype(jnp.bfloat16),
        "b2": cat("b2"),
        "seg_avg": seg_avg,
    }


def init_visual_head_params(key, d_in, hidden, vocab):
    """Deterministic PyTorch-Linear-style uniform init (+/- 1/sqrt(fan_in))."""
    k1, k2, k3, k4 = jax.random.split(key, 4)
    lim1 = 1.0 / jnp.sqrt(d_in)
    lim2 = 1.0 / jnp.sqrt(hidden)
    return {
        "w1": jax.random.uniform(k1, (d_in, hidden), jnp.float32, -lim1, lim1),
        "b1": jax.random.uniform(k2, (1, hidden), jnp.float32, -lim1, lim1),
        "gamma": jnp.ones((1, hidden), jnp.float32),
        "beta": jnp.zeros((1, hidden), jnp.float32),
        "w2": jax.random.uniform(k3, (hidden, vocab), jnp.float32, -lim2, lim2),
        "b2": jax.random.uniform(k4, (1, vocab), jnp.float32, -lim2, lim2),
    }


# ---------------------------------------------------------------------------
# Forward wrapper
# ---------------------------------------------------------------------------
def recognition_head_forward(packed, left_output, right_output, fuse_output,
                             body_output, mask_head, valid_len_in):
    # TODO(synk): mask_head / valid_len_in feed MaskedNorm statistics and
    # valid_len_out in the full VisualHead; accepted but unused here.
    del mask_head, valid_len_in
    b, t, d = left_output.shape
    n = b * t
    assert NUM_HEADS * d == packed["w1_bd"].shape[0]

    # Row tiling: one step for tiny inputs; otherwise >= 2 "parallel" steps so v7x
    # can shard rows across its two TensorCores, capped at MAX_TILE_ROWS.
    n8 = _round_up(n, 8)
    if n8 <= SINGLE_STEP_ROWS:
        tile = n8
    else:
        tile = min(MAX_TILE_ROWS, _round_up(pl.cdiv(n8, 2), 8))
    n_pad = pl.cdiv(n, tile) * tile

    def _rows(x):  # (b, t, d) -> (n_pad, d); pad only for ragged row counts
        x = x.reshape(n, d)
        return x if n_pad == n else jnp.pad(x, ((0, n_pad - n), (0, 0)))

    streams = [_rows(s) for s in (left_output, right_output, fuse_output, body_output)]

    full = lambda shape: pl.BlockSpec(shape, lambda i: (0, 0))
    rowblk = lambda w: pl.BlockSpec((tile, w), lambda i: (i, 0))

    logits_cat, lse, ens = pl.pallas_call(
        _fused_heads_kernel,
        out_shape=(jax.ShapeDtypeStruct((n_pad, V_PACK), jnp.float32),
                   jax.ShapeDtypeStruct((n_pad, NUM_HEADS), jnp.float32),
                   jax.ShapeDtypeStruct((n_pad, VOCAB), jnp.float32)),
        grid=(n_pad // tile,),
        in_specs=[rowblk(d), rowblk(d), rowblk(d), rowblk(d),   # four token-row streams
                  full((NUM_HEADS * d, HID_PACK)),              # w1_bd (bf16, block-diag)
                  full((1, HID_PACK)),                          # b1
                  full((1, HID_PACK)),                          # ln gamma
                  full((1, HID_PACK)),                          # ln beta
                  full((HID_PACK, V_PACK)),                     # w2_bd (bf16, block-diag)
                  full((1, V_PACK)),                            # b2
                  full((HID_PACK, HID_PACK))],                  # seg_avg (hoisted constant)
        out_specs=(rowblk(V_PACK), rowblk(NUM_HEADS), rowblk(VOCAB)),
        compiler_params=pltpu.CompilerParams(
            dimension_semantics=("parallel",),
            vmem_limit_bytes=32 * 1024 * 1024),   # v5e default scoped limit is only 16 MiB
    )(*streams, packed["w1_bd"], packed["b1"], packed["gamma"], packed["beta"],
      packed["w2_bd"], packed["b2"], packed["seg_avg"])

    # Epilogue: exact log-softmax reconstruction (logits - per-head logsumexp).
    logits_nhv = logits_cat[:n].reshape(n, NUM_HEADS, VOCAB)
    prob_log_nhv = logits_nhv - lse[:n][:, :, None]

    outputs = {
        "ensemble_last_gloss_logits": ens[:n].reshape(b, t, VOCAB),
        "fuse": fuse_output,
    }
    for hix, name in enumerate(HEAD_ORDER):
        outputs[f"{name}_gloss_logits"] = logits_nhv[:, hix].reshape(b, t, VOCAB)
        outputs[f"{name}_gloss_prob_log"] = prob_log_nhv[:, hix].reshape(b, t, VOCAB)
    return outputs


# ---------------------------------------------------------------------------
# Pure-JAX reference (same math: bf16 matmul inputs, f32 stats/softmax)
# ---------------------------------------------------------------------------
def recognition_head_reference(params, left_output, right_output, fuse_output, body_output):
    streams = {"left": left_output, "right": right_output,
               "fuse": fuse_output, "body": body_output}
    out = {}
    prob_sum = 0.0
    for name in HEAD_ORDER:
        p = params[name]
        x = streams[name].astype(jnp.bfloat16)
        h = jnp.dot(x, p["w1"].astype(jnp.bfloat16),
                    preferred_element_type=jnp.float32) + p["b1"]
        mu = jnp.mean(h, axis=-1, keepdims=True)
        var = jnp.mean(jnp.square(h - mu), axis=-1, keepdims=True)
        hn = (h - mu) * jax.lax.rsqrt(var + LN_EPS) * p["gamma"] + p["beta"]
        a = jnp.maximum(hn, 0.0)
        logits = jnp.dot(a.astype(jnp.bfloat16), p["w2"].astype(jnp.bfloat16),
                         preferred_element_type=jnp.float32) + p["b2"]
        m = jnp.max(logits, axis=-1, keepdims=True)
        e = jnp.exp(logits - m)
        s = jnp.sum(e, axis=-1, keepdims=True)
        out[f"{name}_gloss_logits"] = logits
        out[f"{name}_gloss_prob_log"] = logits - (m + jnp.log(s))
        prob_sum = prob_sum + e / s
    out["ensemble_last_gloss_logits"] = jnp.log(prob_sum)
    return out


if __name__ == "__main__":
    root = jax.random.PRNGKey(0)
    k_par, k_l, k_r, k_f, k_b = jax.random.split(root, 5)
    kp = jax.random.split(k_par, NUM_HEADS)

    params = {name: init_visual_head_params(kp[i], D_IN, HID, VOCAB)
              for i, name in enumerate(HEAD_ORDER)}
    packed = pack_recognition_head_params(params)

    left_output = jax.random.normal(k_l, (B, T, D_IN), jnp.float32)
    right_output = jax.random.normal(k_r, (B, T, D_IN), jnp.float32)
    fuse_output = jax.random.normal(k_f, (B, T, D_IN), jnp.float32)
    body_output = jax.random.normal(k_b, (B, T, D_IN), jnp.float32)
    mask_head = jnp.ones((B, T), jnp.bool_)
    valid_len_in = jnp.full((B,), T, jnp.int32)

    fwd = jax.jit(functools.partial(recognition_head_forward, packed))
    outputs = fwd(left_output, right_output, fuse_output, body_output,
                  mask_head, valid_len_in)
    jax.block_until_ready(outputs)

    ref = jax.jit(functools.partial(recognition_head_reference, params))(
        left_output, right_output, fuse_output, body_output)

    def _max_abs_diff(key):
        return float(jnp.max(jnp.abs(outputs[key] - ref[key])))

    assert outputs["ensemble_last_gloss_logits"].shape == (B, T, VOCAB)
    for name in HEAD_ORDER:
        assert outputs[f"{name}_gloss_logits"].shape == (B, T, VOCAB)
        assert outputs[f"{name}_gloss_prob_log"].shape == (B, T, VOCAB)
        assert _max_abs_diff(f"{name}_gloss_logits") < 2e-2
        assert _max_abs_diff(f"{name}_gloss_prob_log") < 2e-2
    # Ensemble uses the in-kernel EUP approx reciprocal -> slightly looser bound.
    assert _max_abs_diff("ensemble_last_gloss_logits") < 5e-2
    assert bool(jnp.all(jnp.isfinite(outputs["ensemble_last_gloss_logits"])))
    print("KERNEL_OK")
</pallas_src>

<mosaic_0001>
module attributes {stable_mosaic.version = 11 : i64} {
  func.func @_fused_heads_kernel(%arg0: i32, %arg1: memref<16x32xf32, #tpu.memory_space<vmem>>, %arg2: memref<16x32xf32, #tpu.memory_space<vmem>>, %arg3: memref<16x32xf32, #tpu.memory_space<vmem>>, %arg4: memref<16x32xf32, #tpu.memory_space<vmem>>, %arg5: memref<128x128xbf16, #tpu.memory_space<vmem>>, %arg6: memref<1x128xf32, #tpu.memory_space<vmem>>, %arg7: memref<1x128xf32, #tpu.memory_space<vmem>>, %arg8: memref<1x128xf32, #tpu.memory_space<vmem>>, %arg9: memref<128x512xbf16, #tpu.memory_space<vmem>>, %arg10: memref<1x512xf32, #tpu.memory_space<vmem>>, %arg11: memref<128x128xf32, #tpu.memory_space<vmem>>, %arg12: memref<16x512xf32, #tpu.memory_space<vmem>>, %arg13: memref<16x4xf32, #tpu.memory_space<vmem>>, %arg14: memref<16x128xf32, #tpu.memory_space<vmem>>) attributes {dimension_semantics = [#tpu.dimension_semantics<parallel>], iteration_bounds = array<i64: 1>, scalar_prefetch = 0 : i64, scratch_operands = 0 : i64, tpu.core_type = #tpu.core_type<tc>, window_params = [{transform_indices = @transform_0, window_bounds = array<i64: 16, 32>}, {transform_indices = @transform_1, window_bounds = array<i64: 16, 32>}, {transform_indices = @transform_2, window_bounds = array<i64: 16, 32>}, {transform_indices = @transform_3, window_bounds = array<i64: 16, 32>}, {pipeline_mode = #tpu.pipeline_mode<synchronous>, transform_indices = @transform_4, window_bounds = array<i64: 128, 128>}, {pipeline_mode = #tpu.pipeline_mode<synchronous>, transform_indices = @transform_5, window_bounds = array<i64: 1, 128>}, {pipeline_mode = #tpu.pipeline_mode<synchronous>, transform_indices = @transform_6, window_bounds = array<i64: 1, 128>}, {pipeline_mode = #tpu.pipeline_mode<synchronous>, transform_indices = @transform_7, window_bounds = array<i64: 1, 128>}, {pipeline_mode = #tpu.pipeline_mode<synchronous>, transform_indices = @transform_8, window_bounds = array<i64: 128, 512>}, {pipeline_mode = #tpu.pipeline_mode<synchronous>, transform_indices = @transform_9, window_bounds = array<i64: 1, 512>}, {pipeline_mode = #tpu.pipeline_mode<synchronous>, transform_indices = @transform_10, window_bounds = array<i64: 128, 128>}, {transform_indices = @transform_11, window_bounds = array<i64: 16, 512>}, {transform_indices = @transform_12, window_bounds = array<i64: 16, 4>}, {transform_indices = @transform_13, window_bounds = array<i64: 16, 128>}]} {
    %c0 = arith.constant 0 : index
    %c0_0 = arith.constant 0 : index
    %0 = vector.load %arg1[%c0, %c0_0] : memref<16x32xf32, #tpu.memory_space<vmem>>, vector<16x32xf32>
    %1 = arith.truncf %0 : vector<16x32xf32> to vector<16x32xbf16>
    %c0_1 = arith.constant 0 : index
    %c0_2 = arith.constant 0 : index
    %2 = vector.load %arg5[%c0_1, %c0_2] : memref<128x128xbf16, #tpu.memory_space<vmem>>, vector<32x128xbf16>
    %cst = arith.constant dense<0.000000e+00> : vector<16x128xf32>
    %3 = tpu.matmul %1, %2, %cst {dimension_numbers = #tpu.dot_dimension_numbers<[1], [0], [0], [1], [0, 0, 1, 1], [], []>} : vector<16x32xbf16>, vector<32x128xbf16>, vector<16x128xf32> -> vector<16x128xf32>
    %c0_3 = arith.constant 0 : index
    %c0_4 = arith.constant 0 : index
    %4 = vector.load %arg2[%c0_3, %c0_4] : memref<16x32xf32, #tpu.memory_space<vmem>>, vector<16x32xf32>
    %5 = arith.truncf %4 : vector<16x32xf32> to vector<16x32xbf16>
    %c32 = arith.constant 32 : index
    %c0_5 = arith.constant 0 : index
    %6 = vector.load %arg5[%c32, %c0_5] : memref<128x128xbf16, #tpu.memory_space<vmem>>, vector<32x128xbf16>
    %cst_6 = arith.constant dense<0.000000e+00> : vector<16x128xf32>
    %7 = tpu.matmul %5, %6, %cst_6 {dimension_numbers = #tpu.dot_dimension_numbers<[1], [0], [0], [1], [0, 0, 1, 1], [], []>} : vector<16x32xbf16>, vector<32x128xbf16>, vector<16x128xf32> -> vector<16x128xf32>
    %8 = arith.addf %3, %7 : vector<16x128xf32>
    %c0_7 = arith.constant 0 : index
    %c0_8 = arith.constant 0 : index
    %9 = vector.load %arg3[%c0_7, %c0_8] : memref<16x32xf32, #tpu.memory_space<vmem>>, vector<16x32xf32>
    %10 = arith.truncf %9 : vector<16x32xf32> to vector<16x32xbf16>
    %c64 = arith.constant 64 : index
    %c0_9 = arith.constant 0 : index
    %11 = vector.load %arg5[%c64, %c0_9] : memref<128x128xbf16, #tpu.memory_space<vmem>>, vector<32x128xbf16>
    %cst_10 = arith.constant dense<0.000000e+00> : vector<16x128xf32>
    %12 = tpu.matmul %10, %11, %cst_10 {dimension_numbers = #tpu.dot_dimension_numbers<[1], [0], [0], [1], [0, 0, 1, 1], [], []>} : vector<16x32xbf16>, vector<32x128xbf16>, vector<16x128xf32> -> vector<16x128xf32>
    %13 = arith.addf %8, %12 : vector<16x128xf32>
    %c0_11 = arith.constant 0 : index
    %c0_12 = arith.constant 0 : index
    %14 = vector.load %arg4[%c0_11, %c0_12] : memref<16x32xf32, #tpu.memory_space<vmem>>, vector<16x32xf32>
    %15 = arith.truncf %14 : vector<16x32xf32> to vector<16x32xbf16>
    %c96 = arith.constant 96 : index
    %c0_13 = arith.constant 0 : index
    %16 = vector.load %arg5[%c96, %c0_13] : memref<128x128xbf16, #tpu.memory_space<vmem>>, vector<32x128xbf16>
    %cst_14 = arith.constant dense<0.000000e+00> : vector<16x128xf32>
    %17 = tpu.matmul %15, %16, %cst_14 {dimension_numbers = #tpu.dot_dimension_numbers<[1], [0], [0], [1], [0, 0, 1, 1], [], []>} : vector<16x32xbf16>, vector<32x128xbf16>, vector<16x128xf32> -> vector<16x128xf32>
    %18 = arith.addf %13, %17 : vector<16x128xf32>
    %c0_15 = arith.constant 0 : index
    %c0_16 = arith.constant 0 : index
    %19 = vector.load %arg6[%c0_15, %c0_16] : memref<1x128xf32, #tpu.memory_space<vmem>>, vector<1x128xf32>
    %20 = vector.broadcast %19 : vector<1x128xf32> to vector<16x128xf32>
    %21 = arith.addf %18, %20 : vector<16x128xf32>
    %c0_17 = arith.constant 0 : index
    %c0_18 = arith.constant 0 : index
    %22 = vector.load %arg11[%c0_17, %c0_18] : memref<128x128xf32, #tpu.memory_space<vmem>>, vector<128x128xf32>
    %cst_19 = arith.constant dense<0.000000e+00> : vector<16x128xf32>
    %23 = tpu.matmul %21, %22, %cst_19 {dimension_numbers = #tpu.dot_dimension_numbers<[1], [0], [0], [1], [0, 0, 1, 1], [], []>} : vector<16x128xf32>, vector<128x128xf32>, vector<16x128xf32> -> vector<16x128xf32>
    %24 = arith.mulf %21, %21 : vector<16x128xf32>
    %cst_20 = arith.constant dense<0.000000e+00> : vector<16x128xf32>
    %25 = tpu.matmul %24, %22, %cst_20 {dimension_numbers = #tpu.dot_dimension_numbers<[1], [0], [0], [1], [0, 0, 1, 1], [], []>} : vector<16x128xf32>, vector<128x128xf32>, vector<16x128xf32> -> vector<16x128xf32>
    %26 = arith.mulf %23, %23 : vector<16x128xf32>
    %27 = arith.subf %25, %26 : vector<16x128xf32>
    %cst_21 = arith.constant 0.000000e+00 : f32
    %28 = vector.broadcast %cst_21 : f32 to vector<16x128xf32>
    %29 = arith.maximumf %27, %28 : vector<16x128xf32>
    %30 = arith.subf %21, %23 : vector<16x128xf32>
    %cst_22 = arith.constant 9.99999997E-7 : f32
    %31 = vector.broadcast %cst_22 : f32 to vector<16x128xf32>
    %32 = arith.addf %29, %31 : vector<16x128xf32>
    %33 = math.rsqrt %32 : vector<16x128xf32>
    %34 = arith.mulf %30, %33 : vector<16x128xf32>
    %c0_23 = arith.constant 0 : index
    %c0_24 = arith.constant 0 : index
    %35 = vector.load %arg7[%c0_23, %c0_24] : memref<1x128xf32, #tpu.memory_space<vmem>>, vector<1x128xf32>
    %36 = vector.broadcast %35 : vector<1x128xf32> to vector<16x128xf32>
    %37 = arith.mulf %34, %36 : vector<16x128xf32>
    %c0_25 = arith.constant 0 : index
    %c0_26 = arith.constant 0 : index
    %38 = vector.load %arg8[%c0_25, %c0_26] : memref<1x128xf32, #tpu.memory_space<vmem>>, vector<1x128xf32>
    %39 = vector.broadcast %38 : vector<1x128xf32> to vector<16x128xf32>
    %40 = arith.addf %37, %39 : vector<16x128xf32>
    %cst_27 = arith.constant 0.000000e+00 : f32
    %41 = vector.broadcast %cst_27 : f32 to vector<16x128xf32>
    %42 = arith.maximumf %40, %41 : vector<16x128xf32>
    %43 = arith.truncf %42 : vector<16x128xf32> to vector<16x128xbf16>
    %c0_28 = arith.constant 0 : index
    %c0_29 = arith.constant 0 : index
    %44 = vector.load %arg9[%c0_28, %c0_29] : memref<128x512xbf16, #tpu.memory_space<vmem>>, vector<128x512xbf16>
    %cst_30 = arith.constant dense<0.000000e+00> : vector<16x512xf32>
    %45 = tpu.matmul %43, %44, %cst_30 {dimension_numbers = #tpu.dot_dimension_numbers<[1], [0], [0], [1], [0, 0, 1, 1], [], []>} : vector<16x128xbf16>, vector<128x512xbf16>, vector<16x512xf32> -> vector<16x512xf32>
    %c0_31 = arith.constant 0 : index
    %c0_32 = arith.constant 0 : index
    %46 = vector.load %arg10[%c0_31, %c0_32] : memref<1x512xf32, #tpu.memory_space<vmem>>, vector<1x512xf32>
    %47 = vector.broadcast %46 : vector<1x512xf32> to vector<16x512xf32>
    %48 = arith.addf %45, %47 : vector<16x512xf32>
    %c0_33 = arith.constant 0 : index
    %c0_34 = arith.constant 0 : index
    %49 = vector.load %arg12[%c0_33, %c0_34] : memref<16x512xf32, #tpu.memory_space<vmem>>, vector<16x512xf32>
    tpu.vector_store %arg12[%c0_33, %c0_34], %48 {strides = array<i32>} : memref<16x512xf32, #tpu.memory_space<vmem>>, vector<16x512xf32>,
    %50 = tpu.iota {dimensions = array<i32: 1>} : vector<16x4xi32>
    %cst_35 = arith.constant 0.000000e+00 : f32
    %51 = vector.broadcast %cst_35 : f32 to vector<16x4xf32>
    %cst_36 = arith.constant 0.000000e+00 : f32
    %52 = vector.broadcast %cst_36 : f32 to vector<16x128xf32>
    %53 = vector.extract_strided_slice %48 {offsets = [0, 0], sizes = [16, 128], strides = [1, 1]} : vector<16x512xf32> to vector<16x128xf32>
    %cst_37 = arith.constant dense<0xFF800000> : vector<16xf32>
    %54 = vector.multi_reduction <maximumf>, %53, %cst_37 [1] : vector<16x128xf32> to vector<16xf32>
    %55 = vector.shape_cast %54 : vector<16xf32> to vector<16x1xf32>
    %56 = vector.broadcast %55 : vector<16x1xf32> to vector<16x128xf32>
    %57 = arith.subf %53, %56 : vector<16x128xf32>
    %58 = math.exp %57 : vector<16x128xf32>
    %cst_38 = arith.constant dense<0.000000e+00> : vector<16xf32>
    %59 = vector.multi_reduction <add>, %58, %cst_38 [1] : vector<16x128xf32> to vector<16xf32>
    %60 = vector.shape_cast %59 : vector<16xf32> to vector<16x1xf32>
    %c0_i32 = arith.constant 0 : i32
    %61 = vector.broadcast %c0_i32 : i32 to vector<16x4xi32>
    %62 = arith.cmpi eq, %50, %61 : vector<16x4xi32>
    %63 = math.log %60 : vector<16x1xf32>
    %64 = arith.addf %55, %63 : vector<16x1xf32>
    %65 = vector.shape_cast %64 : vector<16x1xf32> to vector<16x1xf32>
    %66 = vector.broadcast %65 : vector<16x1xf32> to vector<16x4xf32>
    %67 = arith.select %62, %66, %51 : vector<16x4xi1>, vector<16x4xf32>
    %68 = tpu.reciprocal %60 {approx = true} : vector<16x1xf32> -> vector<16x1xf32>
    %69 = vector.broadcast %68 : vector<16x1xf32> to vector<16x128xf32>
    %70 = arith.mulf %58, %69 : vector<16x128xf32>
    %71 = arith.addf %52, %70 : vector<16x128xf32>
    %72 = vector.extract_strided_slice %48 {offsets = [0, 128], sizes = [16, 128], strides = [1, 1]} : vector<16x512xf32> to vector<16x128xf32>
    %cst_39 = arith.constant dense<0xFF800000> : vector<16xf32>
    %73 = vector.multi_reduction <maximumf>, %72, %cst_39 [1] : vector<16x128xf32> to vector<16xf32>
    %74 = vector.shape_cast %73 : vector<16xf32> to vector<16x1xf32>
    %75 = vector.broadcast %74 : vector<16x1xf32> to vector<16x128xf32>
    %76 = arith.subf %72, %75 : vector<16x128xf32>
    %77 = math.exp %76 : vector<16x128xf32>
    %cst_40 = arith.constant dense<0.000000e+00> : vector<16xf32>
    %78 = vector.multi_reduction <add>, %77, %cst_40 [1] : vector<16x128xf32> to vector<16xf32>
    %79 = vector.shape_cast %78 : vector<16xf32> to vector<16x1xf32>
    %c1_i32 = arith.constant 1 : i32
    %80 = vector.broadcast %c1_i32 : i32 to vector<16x4xi32>
    %81 = arith.cmpi eq, %50, %80 : vector<16x4xi32>
    %82 = math.log %79 : vector<16x1xf32>
    %83 = arith.addf %74, %82 : vector<16x1xf32>
    %84 = vector.shape_cast %83 : vector<16x1xf32> to vector<16x1xf32>
    %85 = vector.broadcast %84 : vector<16x1xf32> to vector<16x4xf32>
    %86 = arith.select %81, %85, %67 : vector<16x4xi1>, vector<16x4xf32>
    %87 = tpu.reciprocal %79 {approx = true} : vector<16x1xf32> -> vector<16x1xf32>
    %88 = vector.broadcast %87 : vector<16x1xf32> to vector<16x128xf32>
    %89 = arith.mulf %77, %88 : vector<16x128xf32>
    %90 = arith.addf %71, %89 : vector<16x128xf32>
    %91 = vector.extract_strided_slice %48 {offsets = [0, 256], sizes = [16, 128], strides = [1, 1]} : vector<16x512xf32> to vector<16x128xf32>
    %cst_41 = arith.constant dense<0xFF800000> : vector<16xf32>
    %92 = vector.multi_reduction <maximumf>, %91, %cst_41 [1] : vector<16x128xf32> to vector<16xf32>
    %93 = vector.shape_cast %92 : vector<16xf32> to vector<16x1xf32>
    %94 = vector.broadcast %93 : vector<16x1xf32> to vector<16x128xf32>
    %95 = arith.subf %91, %94 : vector<16x128xf32>
    %96 = math.exp %95 : vector<16x128xf32>
    %cst_42 = arith.constant dense<0.000000e+00> : vector<16xf32>
    %97 = vector.multi_reduction <add>, %96, %cst_42 [1] : vector<16x128xf32> to vector<16xf32>
    %98 = vector.shape_cast %97 : vector<16xf32> to vector<16x1xf32>
    %c2_i32 = arith.constant 2 : i32
    %99 = vector.broadcast %c2_i32 : i32 to vector<16x4xi32>
    %100 = arith.cmpi eq, %50, %99 : vector<16x4xi32>
    %101 = math.log %98 : vector<16x1xf32>
    %102 = arith.addf %93, %101 : vector<16x1xf32>
    %103 = vector.shape_cast %102 : vector<16x1xf32> to vector<16x1xf32>
    %104 = vector.broadcast %103 : vector<16x1xf32> to vector<16x4xf32>
    %105 = arith.select %100, %104, %86 : vector<16x4xi1>, vector<16x4xf32>
    %106 = tpu.reciprocal %98 {approx = true} : vector<16x1xf32> -> vector<16x1xf32>
    %107 = vector.broadcast %106 : vector<16x1xf32> to vector<16x128xf32>
    %108 = arith.mulf %96, %107 : vector<16x128xf32>
    %109 = arith.addf %90, %108 : vector<16x128xf32>
    %110 = vector.extract_strided_slice %48 {offsets = [0, 384], sizes = [16, 128], strides = [1, 1]} : vector<16x512xf32> to vector<16x128xf32>
    %cst_43 = arith.constant dense<0xFF800000> : vector<16xf32>
    %111 = vector.multi_reduction <maximumf>, %110, %cst_43 [1] : vector<16x128xf32> to vector<16xf32>
    %112 = vector.shape_cast %111 : vector<16xf32> to vector<16x1xf32>
    %113 = vector.broadcast %112 : vector<16x1xf32> to vector<16x128xf32>
    %114 = arith.subf %110, %113 : vector<16x128xf32>
    %115 = math.exp %114 : vector<16x128xf32>
    %cst_44 = arith.constant dense<0.000000e+00> : vector<16xf32>
    %116 = vector.multi_reduction <add>, %115, %cst_44 [1] : vector<16x128xf32> to vector<16xf32>
    %117 = vector.shape_cast %116 : vector<16xf32> to vector<16x1xf32>
    %c3_i32 = arith.constant 3 : i32
    %118 = vector.broadcast %c3_i32 : i32 to vector<16x4xi32>
    %119 = arith.cmpi eq, %50, %118 : vector<16x4xi32>
    %120 = math.log %117 : vector<16x1xf32>
    %121 = arith.addf %112, %120 : vector<16x1xf32>
    %122 = vector.shape_cast %121 : vector<16x1xf32> to vector<16x1xf32>
    %123 = vector.broadcast %122 : vector<16x1xf32> to vector<16x4xf32>
    %124 = arith.select %119, %123, %105 : vector<16x4xi1>, vector<16x4xf32>
    %125 = tpu.reciprocal %117 {approx = true} : vector<16x1xf32> -> vector<16x1xf32>
    %126 = vector.broadcast %125 : vector<16x1xf32> to vector<16x128xf32>
    %127 = arith.mulf %115, %126 : vector<16x128xf32>
    %128 = arith.addf %109, %127 : vector<16x128xf32>
    %c0_45 = arith.constant 0 : index
    %c0_46 = arith.constant 0 : index
    %129 = vector.load %arg13[%c0_45, %c0_46] : memref<16x4xf32, #tpu.memory_space<vmem>>, vector<16x4xf32>
    tpu.vector_store %arg13[%c0_45, %c0_46], %124 {strides = array<i32>} : memref<16x4xf32, #tpu.memory_space<vmem>>, vector<16x4xf32>,
    %130 = math.log %128 : vector<16x128xf32>
    %c0_47 = arith.constant 0 : index
    %c0_48 = arith.constant 0 : index
    %131 = vector.load %arg14[%c0_47, %c0_48] : memref<16x128xf32, #tpu.memory_space<vmem>>, vector<16x128xf32>
    tpu.vector_store %arg14[%c0_47, %c0_48], %130 {strides = array<i32>} : memref<16x128xf32, #tpu.memory_space<vmem>>, vector<16x128xf32>,
    return
  }
  func.func @transform_0(%arg0: i32) -> (i32, i32) {
    %c0_i32 = arith.constant 0 : i32
    %c0_i32_0 = arith.constant 0 : i32
    return %arg0, %c0_i32 : i32, i32
  }
  func.func @transform_1(%arg0: i32) -> (i32, i32) {
    %c0_i32 = arith.constant 0 : i32
    %c0_i32_0 = arith.constant 0 : i32
    return %arg0, %c0_i32 : i32, i32
  }
  func.func @transform_2(%arg0: i32) -> (i32, i32) {
    %c0_i32 = arith.constant 0 : i32
    %c0_i32_0 = arith.constant 0 : i32
    return %arg0, %c0_i32 : i32, i32
  }
  func.func @transform_3(%arg0: i32) -> (i32, i32) {
    %c0_i32 = arith.constant 0 : i32
    %c0_i32_0 = arith.constant 0 : i32
    return %arg0, %c0_i32 : i32, i32
  }
  func.func @transform_4(%arg0: i32) -> (i32, i32) {
    %c0_i32 = arith.constant 0 : i32
    %c0_i32_0 = arith.constant 0 : i32
    %c0_i32_1 = arith.constant 0 : i32
    return %c0_i32, %c0_i32_0 : i32, i32
  }
  func.func @transform_5(%arg0: i32) -> (i32, i32) {
    %c0_i32 = arith.constant 0 : i32
    %c0_i32_0 = arith.constant 0 : i32
    %c0_i32_1 = arith.constant 0 : i32
    return %c0_i32, %c0_i32_0 : i32, i32
  }
  func.func @transform_6(%arg0: i32) -> (i32, i32) {
    %c0_i32 = arith.constant 0 : i32
    %c0_i32_0 = arith.constant 0 : i32
    %c0_i32_1 = arith.constant 0 : i32
    return %c0_i32, %c0_i32_0 : i32, i32
  }
  func.func @transform_7(%arg0: i32) -> (i32, i32) {
    %c0_i32 = arith.constant 0 : i32
    %c0_i32_0 = arith.constant 0 : i32
    %c0_i32_1 = arith.constant 0 : i32
    return %c0_i32, %c0_i32_0 : i32, i32
  }
  func.func @transform_8(%arg0: i32) -> (i32, i32) {
    %c0_i32 = arith.constant 0 : i32
    %c0_i32_0 = arith.constant 0 : i32
    %c0_i32_1 = arith.constant 0 : i32
    return %c0_i32, %c0_i32_0 : i32, i32
  }
  func.func @transform_9(%arg0: i32) -> (i32, i32) {
    %c0_i32 = arith.constant 0 : i32
    %c0_i32_0 = arith.constant 0 : i32
    %c0_i32_1 = arith.constant 0 : i32
    return %c0_i32, %c0_i32_0 : i32, i32
  }
  func.func @transform_10(%arg0: i32) -> (i32, i32) {
    %c0_i32 = arith.constant 0 : i32
    %c0_i32_0 = arith.constant 0 : i32
    %c0_i32_1 = arith.constant 0 : i32
    return %c0_i32, %c0_i32_0 : i32, i32
  }
  func.func @transform_11(%arg0: i32) -> (i32, i32) {
    %c0_i32 = arith.constant 0 : i32
    %c0_i32_0 = arith.constant 0 : i32
    return %arg0, %c0_i32 : i32, i32
  }
  func.func @transform_12(%arg0: i32) -> (i32, i32) {
    %c0_i32 = arith.constant 0 : i32
    %c0_i32_0 = arith.constant 0 : i32
    return %arg0, %c0_i32 : i32, i32
  }
  func.func @transform_13(%arg0: i32) -> (i32, i32) {
    %c0_i32 = arith.constant 0 : i32
    %c0_i32_0 = arith.constant 0 : i32
    return %arg0, %c0_i32 : i32, i32
  }
}

</mosaic_0001>

<llo_original>
// kernel: recognition_head_forward.1
$region0: #{recognition_head_forward.1}
  #allocation0 [shape = 'u32[]', space=smem, size = 0x4, offset = 0x4, fixed_abs, tag = 'smem constant byte address 0x4 - core index']
  #allocation1 [shape = 'u32[144,128]{1,0:T(1,128)}', space=vmem, size = 0x12000, scoped, tag = 'internal scratch']
  %s0 = inlined_call_operand.vmem [shape: f32[16,32], index: 0, kind: input, shape index: {}]
  %s1 = inlined_call_operand.vmem [shape: f32[16,32], index: 1, kind: input, shape index: {}]
  %s2 = inlined_call_operand.vmem [shape: f32[16,32], index: 2, kind: input, shape index: {}]
  %s3 = inlined_call_operand.vmem [shape: f32[16,32], index: 3, kind: input, shape index: {}]
  %s4 = inlined_call_operand.vmem [shape: bf16[128,128], index: 4, kind: input, shape index: {}]
  %s5 = inlined_call_operand.vmem [shape: f32[1,128], index: 5, kind: input, shape index: {}]
  %s6 = inlined_call_operand.vmem [shape: f32[1,128], index: 6, kind: input, shape index: {}]
  %s7 = inlined_call_operand.vmem [shape: f32[1,128], index: 7, kind: input, shape index: {}]
  %s8 = inlined_call_operand.vmem [shape: bf16[128,512], index: 8, kind: input, shape index: {}]
  %s9 = inlined_call_operand.vmem [shape: f32[1,512], index: 9, kind: input, shape index: {}]
  %s10 = inlined_call_operand.vmem [shape: f32[128,128], index: 10, kind: input, shape index: {}]
  %s11 = inlined_call_operand.vmem [shape: f32[16,512], index: 11, kind: output, shape index: {0}]
  %s12 = inlined_call_operand.vmem [shape: f32[16,4], index: 12, kind: output, shape index: {1}]
  %s13 = inlined_call_operand.hbm [shape: f32[16,128], index: 13, kind: output, shape index: {2}]
  %14 = xla_tuple %s11, %s12, %s13
  %s15 = sld [smem:[#allocation0]]
  $region70: #{recognition_head_forward.1} parent=0
    _
  %s17 = ssub.s32 1, %s15
  %s18 = scalar_select 0, %s17, %s15
  $region1: #{recognition_head_forward.1} parent=0
    #allocation2 [shape = 'u8[8192]{0}', space=vmem, size = 0x2000, scoped, tag = 'output window, operand 2, single buffered']
    #allocation3 [shape = 's32[1]{0}', space=sflag, size = 0x4, scoped, tag = 'scoped memory for recognition_head_forward.1']
    %19 = vsyncpa [#allocation3], 0
    // Predicated region
    $region2: #{recognition_head_forward.1} parent=1 // pred_check
      _
    $region3: #{recognition_head_forward.1} parent=1 // pred_check_branch
      %21 = sbr.rel (0) target = $region5
    $region4: #{recognition_head_forward.1} parent=1 // pred_region
      _
    $region5: #{recognition_head_forward.1} parent=1 // pred_fallthru
      _
    // Predicated region
    $region6: #{recognition_head_forward.1} parent=1 // pred_check
      _
    $region7: #{recognition_head_forward.1} parent=1 // pred_check_branch
      %23 = sbr.rel (0) target = $region9
    $region8: #{recognition_head_forward.1} parent=1 // pred_region
      _
    $region9: #{recognition_head_forward.1} parent=1 // pred_fallthru
      _
    // Predicated region
    $region10: #{recognition_head_forward.1} parent=1 // pred_check
      _
    $region11: #{recognition_head_forward.1} parent=1 // pred_check_branch
      %25 = sbr.rel (0) target = $region13
    $region12: #{recognition_head_forward.1} parent=1 // pred_region
      _
    $region13: #{recognition_head_forward.1} parent=1 // pred_fallthru
      _
    // Predicated region
    $region14: #{recognition_head_forward.1} parent=1 // pred_check
      _
    $region15: #{recognition_head_forward.1} parent=1 // pred_check_branch
      %27 = sbr.rel (0) target = $region17
    $region16: #{recognition_head_forward.1} parent=1 // pred_region
      _
    $region17: #{recognition_head_forward.1} parent=1 // pred_fallthru
      _
    // Predicated region
    $region18: #{recognition_head_forward.1} parent=1 // pred_check
      _
    $region19: #{recognition_head_forward.1} parent=1 // pred_check_branch
      %29 = sbr.rel (0) target = $region21
    $region20: #{recognition_head_forward.1} parent=1 // pred_region
      _
    $region21: #{recognition_head_forward.1} parent=1 // pred_fallthru
      _
    // Predicated region
    $region22: #{recognition_head_forward.1} parent=1 // pred_check
      _
    $region23: #{recognition_head_forward.1} parent=1 // pred_check_branch
      %31 = sbr.rel (0) target = $region25
    $region24: #{recognition_head_forward.1} parent=1 // pred_region
      _
    $region25: #{recognition_head_forward.1} parent=1 // pred_fallthru
      _
    // Predicated region
    $region26: #{recognition_head_forward.1} parent=1 // pred_check
      _
    $region27: #{recognition_head_forward.1} parent=1 // pred_check_branch
      %33 = sbr.rel (0) target = $region29
    $region28: #{recognition_head_forward.1} parent=1 // pred_region
      _
    $region29: #{recognition_head_forward.1} parent=1 // pred_fallthru
      _
    // Predicated region
    $region30: #{recognition_head_forward.1} parent=1 // pred_check
      _
    $region31: #{recognition_head_forward.1} parent=1 // pred_check_branch
      %35 = sbr.rel (0) target = $region33
    $region32: #{recognition_head_forward.1} parent=1 // pred_region
      _
    $region33: #{recognition_head_forward.1} parent=1 // pred_fallthru
      _
    // Predicated region
    $region34: #{recognition_head_forward.1} parent=1 // pred_check
      _
    $region35: #{recognition_head_forward.1} parent=1 // pred_check_branch
      %37 = sbr.rel (0) target = $region37
    $region36: #{recognition_head_forward.1} parent=1 // pred_region
      _
    $region37: #{recognition_head_forward.1} parent=1 // pred_fallthru
      _
    // Predicated region
    $region38: #{recognition_head_forward.1} parent=1 // pred_check
      _
    $region39: #{recognition_head_forward.1} parent=1 // pred_check_branch
      %39 = sbr.rel (0) target = $region41
    $region40: #{recognition_head_forward.1} parent=1 // pred_region
      _
    $region41: #{recognition_head_forward.1} parent=1 // pred_fallthru
      _
    // Predicated region
    $region42: #{recognition_head_forward.1} parent=1 // pred_check
      _
    $region43: #{recognition_head_forward.1} parent=1 // pred_check_branch
      %41 = sbr.rel (0) target = $region45
    $region44: #{recognition_head_forward.1} parent=1 // pred_region
      _
    $region45: #{recognition_head_forward.1} parent=1 // pred_fallthru
      _
    %v43 = vld [vmem:[%s0] sm:$0xff]
    %v44 = vld [vmem:[%s0 + $0x8] sm:$0xff]
    %v45 = vpack.c.bf16 %v44, %v43
    %v46 = vld [vmem:[%s4] sm:$0xf]
    %v47 = vld [vmem:[%s4 + $0x4] sm:$0xf]
    %v48 = vld [vmem:[%s4 + $0x8] sm:$0xf]
    %v49 = vld [vmem:[%s4 + $0xc] sm:$0xf]
    %v50 = vld [vmem:[%s1] sm:$0xff]
    %v51 = vld [vmem:[%s1 + $0x8] sm:$0xff]
    %v52 = vpack.c.bf16 %v51, %v50
    %v53 = vld [vmem:[%s4 + $0x10] sm:$0xf]
    %v54 = vld [vmem:[%s4 + $0x14] sm:$0xf]
    %v55 = vld [vmem:[%s4 + $0x18] sm:$0xf]
    %v56 = vld [vmem:[%s4 + $0x1c] sm:$0xf]
    %v61 = vunpack.c.l.b16 %v53
    %v62 = vunpack.c.l.b16 %v54
    %v63 = vunpack.c.l.b16 %v55
    %v64 = vunpack.c.l.b16 %v56
    %v65 = vpack.c.b16 %v62, %v61
    %v66 = vpack.c.b16 %v64, %v63
    %vm69 = vcmask 261120
    %v71 = vsel %vm69, %v52, 0
    %73 = vmatprep.subr.bf16.mxu0 0
    %74 = vmatpush1.bf16.msra.mxu0 %v65
    %75 = vmatprep.subr.bf16.mxu0 0
    %76 = vmatpush1.bf16.msra.mxu0 %v66
    %77 = vmatprep.subr.bf16.mxu0 0
    %78 = vmatpush1.bf16.msra.mxu0 0
    %79 = vmatprep.subr.bf16.mxu0 0
    %80 = vmatpush1.bf16.msra.mxu0 0
    %81 = vmatprep.subr.bf16.mxu0 0
    %82 = vmatpush1.bf16.msra.mxu0 0
    %83 = vmatprep.subr.bf16.mxu0 0
    %84 = vmatpush1.bf16.msra.mxu0 0
    %85 = vmatprep.subr.bf16.mxu0 0
    %86 = vmatpush1.bf16.msra.mxu0 0
    %87 = vmatprep.subr.bf16.mxu0 0
    %88 = vmatpush1.bf16.msra.mxu0 0
    %89 = vmatprep.subr.bf16.mxu0 0
    %90 = vmatpush1.bf16.msra.mxu0 0
    %91 = vmatprep.subr.bf16.mxu0 0
    %92 = vmatpush1.bf16.msra.mxu0 0
    %93 = vmatprep.subr.bf16.mxu0 0
    %94 = vmatpush1.bf16.msra.mxu0 0
    %95 = vmatprep.subr.bf16.mxu0 0
    %96 = vmatpush1.bf16.msra.mxu0 0
    %97 = vmatprep.subr.bf16.mxu0 0
    %98 = vmatpush1.bf16.msra.mxu0 0
    %99 = vmatprep.subr.bf16.mxu0 0
    %100 = vmatpush1.bf16.msra.mxu0 0
    %101 = vmatprep.subr.bf16.mxu0 0
    %102 = vmatpush1.bf16.msra.mxu0 0
    %103 = vmatprep.subr.bf16.mxu0 0
    %104 = vmatpush1.bf16.msra.mxu0 0
    %105 = vmatprep.mubr.bf16.mxu0 0
    %106 = vmatmul.mubr.bf16.gmra.mrb[0].mxu0 %v71
    %v107 = vpop.f32.mrb[0].mxu0
    %v108 = vadd.f32 0.0, %v107
    %v109 = vpop.f32.mrb[0].mxu0
    %v110 = vpop.f32.mrb[0].mxu0
    %v111 = vadd.f32 0.0, %v110
    %v112 = vpop.f32.mrb[0].mxu0
    %113 = vdwg.mxu0
    %v118 = vunpack.c.l.b16 %v46
    %v119 = vunpack.c.l.b16 %v47
    %v120 = vunpack.c.l.b16 %v48
    %v121 = vunpack.c.l.b16 %v49
    %v122 = vpack.c.b16 %v119, %v118
    %v123 = vpack.c.b16 %v121, %v120
    %v127 = vsel %vm69, %v45, 0
    %129 = vmatprep.subr.bf16.mxu0 0
    %130 = vmatpush1.bf16.msra.mxu0 %v122
    %131 = vmatprep.subr.bf16.mxu0 0
    %132 = vmatpush1.bf16.msra.mxu0 %v123
    %133 = vmatprep.subr.bf16.mxu0 0
    %134 = vmatpush1.bf16.msra.mxu0 0
    %135 = vmatprep.subr.bf16.mxu0 0
    %136 = vmatpush1.bf16.msra.mxu0 0
    %137 = vmatprep.subr.bf16.mxu0 0
    %138 = vmatpush1.bf16.msra.mxu0 0
    %139 = vmatprep.subr.bf16.mxu0 0
    %140 = vmatpush1.bf16.msra.mxu0 0
    %141 = vmatprep.subr.bf16.mxu0 0
    %142 = vmatpush1.bf16.msra.mxu0 0
    %143 = vmatprep.subr.bf16.mxu0 0
    %144 = vmatpush1.bf16.msra.mxu0 0
    %145 = vmatprep.subr.bf16.mxu0 0
    %146 = vmatpush1.bf16.msra.mxu0 0
    %147 = vmatprep.subr.bf16.mxu0 0
    %148 = vmatpush1.bf16.msra.mxu0 0
    %149 = vmatprep.subr.bf16.mxu0 0
    %150 = vmatpush1.bf16.msra.mxu0 0
    %151 = vmatprep.subr.bf16.mxu0 0
    %152 = vmatpush1.bf16.msra.mxu0 0
    %153 = vmatprep.subr.bf16.mxu0 0
    %154 = vmatpush1.bf16.msra.mxu0 0
    %155 = vmatprep.subr.bf16.mxu0 0
    %156 = vmatpush1.bf16.msra.mxu0 0
    %157 = vmatprep.subr.bf16.mxu0 0
    %158 = vmatpush1.bf16.msra.mxu0 0
    %159 = vmatprep.subr.bf16.mxu0 0
    %160 = vmatpush1.bf16.msra.mxu0 0
    %161 = vmatprep.mubr.bf16.mxu0 0
    %162 = vmatmul.mubr.bf16.gmra.mrb[0].mxu0 %v127
    %v163 = vpop.f32.mrb[0].mxu0
    %v164 = vadd.f32 %v108, %v163
    %v165 = vpop.f32.mrb[0].mxu0
    %v166 = vpop.f32.mrb[0].mxu0
    %v167 = vadd.f32 %v111, %v166
    %v168 = vpop.f32.mrb[0].mxu0
    %169 = vdwg.mxu0
    %v170 = vld [vmem:[%s2] sm:$0xff]
    %v171 = vld [vmem:[%s2 + $0x8] sm:$0xff]
    %v172 = vpack.c.bf16 %v171, %v170
    %v173 = vld [vmem:[%s4 + $0x20] sm:$0xf]
    %v174 = vld [vmem:[%s4 + $0x24] sm:$0xf]
    %v175 = vld [vmem:[%s4 + $0x28] sm:$0xf]
    %v176 = vld [vmem:[%s4 + $0x2c] sm:$0xf]
    %v181 = vunpack.c.l.b16 %v173
    %v182 = vunpack.c.l.b16 %v174
    %v183 = vunpack.c.l.b16 %v175
    %v184 = vunpack.c.l.b16 %v176
    %v185 = vpack.c.b16 %v182, %v181
    %v186 = vpack.c.b16 %v184, %v183
    %v190 = vsel %vm69, %v172, 0
    %192 = vmatprep.subr.bf16.mxu0 0
    %193 = vmatpush1.bf16.msra.mxu0 %v185
    %194 = vmatprep.subr.bf16.mxu0 0
    %195 = vmatpush1.bf16.msra.mxu0 %v186
    %196 = vmatprep.subr.bf16.mxu0 0
    %197 = vmatpush1.bf16.msra.mxu0 0
    %198 = vmatprep.subr.bf16.mxu0 0
    %199 = vmatpush1.bf16.msra.mxu0 0
    %200 = vmatprep.subr.bf16.mxu0 0
    %201 = vmatpush1.bf16.msra.mxu0 0
    %202 = vmatprep.subr.bf16.mxu0 0
    %203 = vmatpush1.bf16.msra.mxu0 0
    %204 = vmatprep.subr.bf16.mxu0 0
    %205 = vmatpush1.bf16.msra.mxu0 0
    %206 = vmatprep.subr.bf16.mxu0 0
    %207 = vmatpush1.bf16.msra.mxu0 0
    %208 = vmatprep.subr.bf16.mxu0 0
    %209 = vmatpush1.bf16.msra.mxu0 0
    %210 = vmatprep.subr.bf16.mxu0 0
    %211 = vmatpush1.bf16.msra.mxu0 0
    %212 = vmatprep.subr.bf16.mxu0 0
    %213 = vmatpush1.bf16.msra.mxu0 0
    %214 = vmatprep.subr.bf16.mxu0 0
    %215 = vmatpush1.bf16.msra.mxu0 0
    %216 = vmatprep.subr.bf16.mxu0 0
    %217 = vmatpush1.bf16.msra.mxu0 0
    %218 = vmatprep.subr.bf16.mxu0 0
    %219 = vmatpush1.bf16.msra.mxu0 0
    %220 = vmatprep.subr.bf16.mxu0 0
    %221 = vmatpush1.bf16.msra.mxu0 0
    %222 = vmatprep.subr.bf16.mxu0 0
    %223 = vmatpush1.bf16.msra.mxu0 0
    %224 = vmatprep.mubr.bf16.mxu0 0
    %225 = vmatmul.mubr.bf16.gmra.mrb[0].mxu0 %v190
    %v226 = vpop.f32.mrb[0].mxu0
    %v227 = vadd.f32 0.0, %v226
    %v228 = vpop.f32.mrb[0].mxu0
    %v229 = vpop.f32.mrb[0].mxu0
    %v230 = vadd.f32 0.0, %v229
    %v231 = vpop.f32.mrb[0].mxu0
    %232 = vdwg.mxu0
    %v233 = vadd.f32 %v164, %v227
    %v234 = vadd.f32 %v167, %v230
    %v235 = vld [vmem:[%s3] sm:$0xff]
    %v236 = vld [vmem:[%s3 + $0x8] sm:$0xff]
    %v237 = vpack.c.bf16 %v236, %v235
    %v238 = vld [vmem:[%s4 + $0x30] sm:$0xf]
    %v239 = vld [vmem:[%s4 + $0x34] sm:$0xf]
    %v240 = vld [vmem:[%s4 + $0x38] sm:$0xf]
    %v241 = vld [vmem:[%s4 + $0x3c] sm:$0xf]
    %v246 = vunpack.c.l.b16 %v238
    %v247 = vunpack.c.l.b16 %v239
    %v248 = vunpack.c.l.b16 %v240
    %v249 = vunpack.c.l.b16 %v241
    %v250 = vpack.c.b16 %v247, %v246
    %v251 = vpack.c.b16 %v249, %v248
    %v255 = vsel %vm69, %v237, 0
    %257 = vmatprep.subr.bf16.mxu0 0
    %258 = vmatpush1.bf16.msra.mxu0 %v250
    %259 = vmatprep.subr.bf16.mxu0 0
    %260 = vmatpush1.bf16.msra.mxu0 %v251
    %261 = vmatprep.subr.bf16.mxu0 0
    %262 = vmatpush1.bf16.msra.mxu0 0
    %263 = vmatprep.subr.bf16.mxu0 0
    %264 = vmatpush1.bf16.msra.mxu0 0
    %265 = vmatprep.subr.bf16.mxu0 0
    %266 = vmatpush1.bf16.msra.mxu0 0
    %267 = vmatprep.subr.bf16.mxu0 0
    %268 = vmatpush1.bf16.msra.mxu0 0
    %269 = vmatprep.subr.bf16.mxu0 0
    %270 = vmatpush1.bf16.msra.mxu0 0
    %271 = vmatprep.subr.bf16.mxu0 0
    %272 = vmatpush1.bf16.msra.mxu0 0
    %273 = vmatprep.subr.bf16.mxu0 0
    %274 = vmatpush1.bf16.msra.mxu0 0
    %275 = vmatprep.subr.bf16.mxu0 0
    %276 = vmatpush1.bf16.msra.mxu0 0
    %277 = vmatprep.subr.bf16.mxu0 0
    %278 = vmatpush1.bf16.msra.mxu0 0
    %279 = vmatprep.subr.bf16.mxu0 0
    %280 = vmatpush1.bf16.msra.mxu0 0
    %281 = vmatprep.subr.bf16.mxu0 0
    %282 = vmatpush1.bf16.msra.mxu0 0
    %283 = vmatprep.subr.bf16.mxu0 0
    %284 = vmatpush1.bf16.msra.mxu0 0
    %285 = vmatprep.subr.bf16.mxu0 0
    %286 = vmatpush1.bf16.msra.mxu0 0
    %287 = vmatprep.subr.bf16.mxu0 0
    %288 = vmatpush1.bf16.msra.mxu0 0
    %289 = vmatprep.mubr.bf16.mxu0 0
    %290 = vmatmul.mubr.bf16.gmra.mrb[0].mxu0 %v255
    %v291 = vpop.f32.mrb[0].mxu0
    %v292 = vadd.f32 0.0, %v291
    %v293 = vpop.f32.mrb[0].mxu0
    %v294 = vpop.f32.mrb[0].mxu0
    %v295 = vadd.f32 0.0, %v294
    %v296 = vpop.f32.mrb[0].mxu0
    %297 = vdwg.mxu0
    %v298 = vadd.f32 %v233, %v292
    %v299 = vadd.f32 %v234, %v295
    %v300 = vld [vmem:[%s5] sm:$0x1]
    %v302 = vlaneseq
    %v303 = vshrl.u32 %v302, 7
    %v304 = vsub.s32 0, %v303
    %v305 = vrot.slane %v300, %v304
    %v307 = vadd.f32 %v298, %v305
    %v308 = vadd.f32 %v299, %v305
    %v309 = vld [vmem:[%s10] sm:$0xff]
    %v310 = vld [vmem:[%s10 + $0x8] sm:$0xff]
    %v311 = vld [vmem:[%s10 + $0x10] sm:$0xff]
    %v312 = vld [vmem:[%s10 + $0x18] sm:$0xff]
    %v313 = vld [vmem:[%s10 + $0x20] sm:$0xff]
    %v314 = vld [vmem:[%s10 + $0x28] sm:$0xff]
    %v315 = vld [vmem:[%s10 + $0x30] sm:$0xff]
    %v316 = vld [vmem:[%s10 + $0x38] sm:$0xff]
    %v317 = vld [vmem:[%s10 + $0x40] sm:$0xff]
    %v318 = vld [vmem:[%s10 + $0x48] sm:$0xff]
    %v319 = vld [vmem:[%s10 + $0x50] sm:$0xff]
    %v320 = vld [vmem:[%s10 + $0x58] sm:$0xff]
    %v321 = vld [vmem:[%s10 + $0x60] sm:$0xff]
    %v322 = vld [vmem:[%s10 + $0x68] sm:$0xff]
    %v323 = vld [vmem:[%s10 + $0x70] sm:$0xff]
    %v324 = vld [vmem:[%s10 + $0x78] sm:$0xff]
    %325 = vmatprep.subr.mxu0 0.0
    %326 = vmatpush1.msra.mxu0 %v309
    %327 = vmatprep.subr.mxu0 0.0
    %328 = vmatpush1.msra.mxu0 %v310
    %329 = vmatprep.subr.mxu0 0.0
    %330 = vmatpush1.msra.mxu0 %v311
    %331 = vmatprep.subr.mxu0 0.0
    %332 = vmatpush1.msra.mxu0 %v312
    %333 = vmatprep.subr.mxu0 0.0
    %334 = vmatpush1.msra.mxu0 %v313
    %335 = vmatprep.subr.mxu0 0.0
    %336 = vmatpush1.msra.mxu0 %v314
    %337 = vmatprep.subr.mxu0 0.0
    %338 = vmatpush1.msra.mxu0 %v315
    %339 = vmatprep.subr.mxu0 0.0
    %340 = vmatpush1.msra.mxu0 %v316
    %341 = vmatprep.subr.mxu0 0.0
    %342 = vmatpush1.msra.mxu0 %v317
    %343 = vmatprep.subr.mxu0 0.0
    %344 = vmatpush1.msra.mxu0 %v318
    %345 = vmatprep.subr.mxu0 0.0
    %346 = vmatpush1.msra.mxu0 %v319
    %347 = vmatprep.subr.mxu0 0.0
    %348 = vmatpush1.msra.mxu0 %v320
    %349 = vmatprep.subr.mxu0 0.0
    %350 = vmatpush1.msra.mxu0 %v321
    %351 = vmatprep.subr.mxu0 0.0
    %352 = vmatpush1.msra.mxu0 %v322
    %353 = vmatprep.subr.mxu0 0.0
    %354 = vmatpush1.msra.mxu0 %v323
    %355 = vmatprep.subr.mxu0 0.0
    %356 = vmatpush1.msra.mxu0 %v324
    %357 = vmatprep.subr.mxu0 0.0
    %358 = vmatpush1.msra.mxu0 0.0
    %359 = vmatprep.subr.mxu0 0.0
    %360 = vmatpush1.msra.mxu0 0.0
    %361 = vmatprep.subr.mxu0 0.0
    %362 = vmatpush1.msra.mxu0 0.0
    %363 = vmatprep.subr.mxu0 0.0
    %364 = vmatpush1.msra.mxu0 0.0
    %365 = vmatprep.subr.mxu0 0.0
    %366 = vmatpush1.msra.mxu0 0.0
    %367 = vmatprep.subr.mxu0 0.0
    %368 = vmatpush1.msra.mxu0 0.0
    %369 = vmatprep.subr.mxu0 0.0
    %370 = vmatpush1.msra.mxu0 0.0
    %371 = vmatprep.subr.mxu0 0.0
    %372 = vmatpush1.msra.mxu0 0.0
    %373 = vmatprep.subr.mxu0 0.0
    %374 = vmatpush1.msra.mxu0 0.0
    %375 = vmatprep.subr.mxu0 0.0
    %376 = vmatpush1.msra.mxu0 0.0
    %377 = vmatprep.subr.mxu0 0.0
    %378 = vmatpush1.msra.mxu0 0.0
    %379 = vmatprep.subr.mxu0 0.0
    %380 = vmatpush1.msra.mxu0 0.0
    %381 = vmatprep.subr.mxu0 0.0
    %382 = vmatpush1.msra.mxu0 0.0
    %383 = vmatprep.subr.mxu0 0.0
    %384 = vmatpush1.msra.mxu0 0.0
    %385 = vmatprep.subr.mxu0 0.0
    %386 = vmatpush1.msra.mxu0 0.0
    %387 = vmatprep.subr.mxu0 0.0
    %388 = vmatpush1.msra.mxu0 0.0
    %389 = vmatprep.mubr.f32.mxu0 0.0
    %390 = vmatmul.mubr.f32.gmra.mrb[0].mxu0 %v307
    %v391 = vpop.f32.mrb[0].mxu0
    %v392 = vadd.f32 0.0, %v391
    %v393 = vpop.f32.mrb[0].mxu0
    %394 = vmatprep.mubr.f32.mxu0 0.0
    %395 = vmatmul.mubr.f32.gmra.mrb[0].mxu0 %v308
    %v396 = vpop.f32.mrb[0].mxu0
    %v397 = vadd.f32 0.0, %v396
    %v398 = vpop.f32.mrb[0].mxu0
    %399 = vdwg.mxu0
    %v400 = vmul.f32 %v307, %v307
    %v401 = vmul.f32 %v308, %v308
    %402 = vmatprep.subr.mxu0 0.0
    %403 = vmatpush1.msra.mxu0 %v309
    %404 = vmatprep.subr.mxu0 0.0
    %405 = vmatpush1.msra.mxu0 %v310
    %406 = vmatprep.subr.mxu0 0.0
    %407 = vmatpush1.msra.mxu0 %v311
    %408 = vmatprep.subr.mxu0 0.0
    %409 = vmatpush1.msra.mxu0 %v312
    %410 = vmatprep.subr.mxu0 0.0
    %411 = vmatpush1.msra.mxu0 %v313
    %412 = vmatprep.subr.mxu0 0.0
    %413 = vmatpush1.msra.mxu0 %v314
    %414 = vmatprep.subr.mxu0 0.0
    %415 = vmatpush1.msra.mxu0 %v315
    %416 = vmatprep.subr.mxu0 0.0
    %417 = vmatpush1.msra.mxu0 %v316
    %418 = vmatprep.subr.mxu0 0.0
    %419 = vmatpush1.msra.mxu0 %v317
    %420 = vmatprep.subr.mxu0 0.0
    %421 = vmatpush1.msra.mxu0 %v318
    %422 = vmatprep.subr.mxu0 0.0
    %423 = vmatpush1.msra.mxu0 %v319
    %424 = vmatprep.subr.mxu0 0.0
    %425 = vmatpush1.msra.mxu0 %v320
    %426 = vmatprep.subr.mxu0 0.0
    %427 = vmatpush1.msra.mxu0 %v321
    %428 = vmatprep.subr.mxu0 0.0
    %429 = vmatpush1.msra.mxu0 %v322
    %430 = vmatprep.subr.mxu0 0.0
    %431 = vmatpush1.msra.mxu0 %v323
    %432 = vmatprep.subr.mxu0 0.0
    %433 = vmatpush1.msra.mxu0 %v324
    %434 = vmatprep.subr.mxu0 0.0
    %435 = vmatpush1.msra.mxu0 0.0
    %436 = vmatprep.subr.mxu0 0.0
    %437 = vmatpush1.msra.mxu0 0.0
    %438 = vmatprep.subr.mxu0 0.0
    %439 = vmatpush1.msra.mxu0 0.0
    %440 = vmatprep.subr.mxu0 0.0
    %441 = vmatpush1.msra.mxu0 0.0
    %442 = vmatprep.subr.mxu0 0.0
    %443 = vmatpush1.msra.mxu0 0.0
    %444 = vmatprep.subr.mxu0 0.0
    %445 = vmatpush1.msra.mxu0 0.0
    %446 = vmatprep.subr.mxu0 0.0
    %447 = vmatpush1.msra.mxu0 0.0
    %448 = vmatprep.subr.mxu0 0.0
    %449 = vmatpush1.msra.mxu0 0.0
    %450 = vmatprep.subr.mxu0 0.0
    %451 = vmatpush1.msra.mxu0 0.0
    %452 = vmatprep.subr.mxu0 0.0
    %453 = vmatpush1.msra.mxu0 0.0
    %454 = vmatprep.subr.mxu0 0.0
    %455 = vmatpush1.msra.mxu0 0.0
    %456 = vmatprep.subr.mxu0 0.0
    %457 = vmatpush1.msra.mxu0 0.0
    %458 = vmatprep.subr.mxu0 0.0
    %459 = vmatpush1.msra.mxu0 0.0
    %460 = vmatprep.subr.mxu0 0.0
    %461 = vmatpush1.msra.mxu0 0.0
    %462 = vmatprep.subr.mxu0 0.0
    %463 = vmatpush1.msra.mxu0 0.0
    %464 = vmatprep.subr.mxu0 0.0
    %465 = vmatpush1.msra.mxu0 0.0
    %466 = vmatprep.mubr.f32.mxu0 0.0
    %467 = vmatmul.mubr.f32.gmra.mrb[0].mxu0 %v400
    %v468 = vpop.f32.mrb[0].mxu0
    %v469 = vadd.f32 0.0, %v468
    %v470 = vpop.f32.mrb[0].mxu0
    %471 = vmatprep.mubr.f32.mxu0 0.0
    %472 = vmatmul.mubr.f32.gmra.mrb[0].mxu0 %v401
    %v473 = vpop.f32.mrb[0].mxu0
    %v474 = vadd.f32 0.0, %v473
    %v475 = vpop.f32.mrb[0].mxu0
    %476 = vdwg.mxu0
    %v477 = vmul.f32 %v392, %v392
    %v478 = vmul.f32 %v397, %v397
    %v479 = vsub.f32 %v469, %v477
    %v480 = vsub.f32 %v474, %v478
    %v481 = vmax.f32 %v479, 0.0
    %v482 = vmax.f32 %v480, 0.0
    %v483 = vsub.f32 %v307, %v392
    %v484 = vsub.f32 %v308, %v397
    %v485 = vadd.f32 %v481, 1e-06
    %v486 = vadd.f32 %v482, 1e-06
    %v487 = vrsqrt.pop %v485
    %v488 = vrsqrt.pop %v486
    %v489 = vmul.f32 %v483, %v487
    %v490 = vmul.f32 %v484, %v488
    %v491 = vld [vmem:[%s6] sm:$0x1]
    %v493 = vlaneseq
    %v494 = vshrl.u32 %v493, 7
    %v495 = vsub.s32 0, %v494
    %v496 = vrot.slane %v491, %v495
    %v498 = vmul.f32 %v489, %v496
    %v499 = vmul.f32 %v490, %v496
    %v500 = vld [vmem:[%s7] sm:$0x1]
    %v502 = vlaneseq
    %v503 = vshrl.u32 %v502, 7
    %v504 = vsub.s32 0, %v503
    %v505 = vrot.slane %v500, %v504
    %v507 = vadd.f32 %v498, %v505
    %v508 = vadd.f32 %v499, %v505
    %v509 = vmax.f32 %v507, 0.0
    %v510 = vmax.f32 %v508, 0.0
    %v511 = vpack.c.bf16 %v510, %v509
    %v512 = vld [vmem:[%s8] sm:$0xff]
    %v513 = vld [vmem:[%s8 + $0x8] sm:$0xff]
    %v514 = vld [vmem:[%s8 + $0x10] sm:$0xff]
    %v515 = vld [vmem:[%s8 + $0x18] sm:$0xff]
    %v516 = vld [vmem:[%s8 + $0x20] sm:$0xff]
    %v517 = vld [vmem:[%s8 + $0x28] sm:$0xff]
    %v518 = vld [vmem:[%s8 + $0x30] sm:$0xff]
    %v519 = vld [vmem:[%s8 + $0x38] sm:$0xff]
    %v520 = vld [vmem:[%s8 + $0x40] sm:$0xff]
    %v521 = vld [vmem:[%s8 + $0x48] sm:$0xff]
    %v522 = vld [vmem:[%s8 + $0x50] sm:$0xff]
    %v523 = vld [vmem:[%s8 + $0x58] sm:$0xff]
    %v524 = vld [vmem:[%s8 + $0x60] sm:$0xff]
    %v525 = vld [vmem:[%s8 + $0x68] sm:$0xff]
    %v526 = vld [vmem:[%s8 + $0x70] sm:$0xff]
    %v527 = vld [vmem:[%s8 + $0x78] sm:$0xff]
    %v528 = vld [vmem:[%s8 + $0x80] sm:$0xff]
    %v529 = vld [vmem:[%s8 + $0x88] sm:$0xff]
    %v530 = vld [vmem:[%s8 + $0x90] sm:$0xff]
    %v531 = vld [vmem:[%s8 + $0x98] sm:$0xff]
    %v532 = vld [vmem:[%s8 + $0xa0] sm:$0xff]
    %v533 = vld [vmem:[%s8 + $0xa8] sm:$0xff]
    %v534 = vld [vmem:[%s8 + $0xb0] sm:$0xff]
    %v535 = vld [vmem:[%s8 + $0xb8] sm:$0xff]
    %v536 = vld [vmem:[%s8 + $0xc0] sm:$0xff]
    %v537 = vld [vmem:[%s8 + $0xc8] sm:$0xff]
    %v538 = vld [vmem:[%s8 + $0xd0] sm:$0xff]
    %v539 = vld [vmem:[%s8 + $0xd8] sm:$0xff]
    %v540 = vld [vmem:[%s8 + $0xe0] sm:$0xff]
    %v541 = vld [vmem:[%s8 + $0xe8] sm:$0xff]
    %v542 = vld [vmem:[%s8 + $0xf0] sm:$0xff]
    %v543 = vld [vmem:[%s8 + $0xf8] sm:$0xff]
    %v544 = vld [vmem:[%s9] sm:$0xf]
    %v546 = vlaneseq
    %v547 = vshrl.u32 %v546, 7
    %v548 = vsub.s32 0, %v547
    %v549 = vrot.slane %v544, %v548
    %v550 = vlaneseq
    %v551 = vshrl.u32 %v550, 7
    %v552 = vsub.s32 1, %v551
    %v553 = vrot.slane %v544, %v552
    %v554 = vlaneseq
    %v555 = vshrl.u32 %v554, 7
    %v556 = vsub.s32 2, %v555
    %v557 = vrot.slane %v544, %v556
    %v558 = vlaneseq
    %v559 = vshrl.u32 %v558, 7
    %v560 = vsub.s32 3, %v559
    %v561 = vrot.slane %v544, %v560
    %v598 = vunpack.c.l.b16 %v512
    %v599 = vunpack.c.h.b16 %v512
    %v600 = vunpack.c.l.b16 %v513
    %v601 = vunpack.c.h.b16 %v513
    %v602 = vunpack.c.l.b16 %v514
    %v603 = vunpack.c.h.b16 %v514
    %v604 = vunpack.c.l.b16 %v515
    %v605 = vunpack.c.h.b16 %v515
    %v606 = vunpack.c.l.b16 %v516
    %v607 = vunpack.c.h.b16 %v516
    %v608 = vunpack.c.l.b16 %v517
    %v609 = vunpack.c.h.b16 %v517
    %v610 = vunpack.c.l.b16 %v518
    %v611 = vunpack.c.h.b16 %v518
    %v612 = vunpack.c.l.b16 %v519
    %v613 = vunpack.c.h.b16 %v519
    %v614 = vunpack.c.l.b16 %v520
    %v615 = vunpack.c.h.b16 %v520
    %v616 = vunpack.c.l.b16 %v521
    %v617 = vunpack.c.h.b16 %v521
    %v618 = vunpack.c.l.b16 %v522
    %v619 = vunpack.c.h.b16 %v522
    %v620 = vunpack.c.l.b16 %v523
    %v621 = vunpack.c.h.b16 %v523
    %v622 = vunpack.c.l.b16 %v524
    %v623 = vunpack.c.h.b16 %v524
    %v624 = vunpack.c.l.b16 %v525
    %v625 = vunpack.c.h.b16 %v525
    %v626 = vunpack.c.l.b16 %v526
    %v627 = vunpack.c.h.b16 %v526
    %v628 = vunpack.c.l.b16 %v527
    %v629 = vunpack.c.h.b16 %v527
    %v630 = vunpack.c.l.b16 %v528
    %v631 = vunpack.c.h.b16 %v528
    %v632 = vunpack.c.l.b16 %v529
    %v633 = vunpack.c.h.b16 %v529
    %v634 = vunpack.c.l.b16 %v530
    %v635 = vunpack.c.h.b16 %v530
    %v636 = vunpack.c.l.b16 %v531
    %v637 = vunpack.c.h.b16 %v531
    %v638 = vunpack.c.l.b16 %v532
    %v639 = vunpack.c.h.b16 %v532
    %v640 = vunpack.c.l.b16 %v533
    %v641 = vunpack.c.h.b16 %v533
    %v642 = vunpack.c.l.b16 %v534
    %v643 = vunpack.c.h.b16 %v534
    %v644 = vunpack.c.l.b16 %v535
    %v645 = vunpack.c.h.b16 %v535
    %v646 = vunpack.c.l.b16 %v536
    %v647 = vunpack.c.h.b16 %v536
    %v648 = vunpack.c.l.b16 %v537
    %v649 = vunpack.c.h.b16 %v537
    %v650 = vunpack.c.l.b16 %v538
    %v651 = vunpack.c.h.b16 %v538
    %v652 = vunpack.c.l.b16 %v539
    %v653 = vunpack.c.h.b16 %v539
    %v654 = vunpack.c.l.b16 %v540
    %v655 = vunpack.c.h.b16 %v540
    %v656 = vunpack.c.l.b16 %v541
    %v657 = vunpack.c.h.b16 %v541
    %v658 = vunpack.c.l.b16 %v542
    %v659 = vunpack.c.h.b16 %v542
    %v660 = vunpack.c.l.b16 %v543
    %v661 = vunpack.c.h.b16 %v543
    %v662 = vpack.c.b16 %v602, %v598
    %v663 = vpack.c.b16 %v603, %v599
    %v664 = vpack.c.b16 %v604, %v600
    %v665 = vpack.c.b16 %v605, %v601
    %v666 = vpack.c.b16 %v610, %v606
    %v667 = vpack.c.b16 %v611, %v607
    %v668 = vpack.c.b16 %v612, %v608
    %v669 = vpack.c.b16 %v613, %v609
    %v670 = vpack.c.b16 %v618, %v614
    %v671 = vpack.c.b16 %v619, %v615
    %v672 = vpack.c.b16 %v620, %v616
    %v673 = vpack.c.b16 %v621, %v617
    %v674 = vpack.c.b16 %v626, %v622
    %v675 = vpack.c.b16 %v627, %v623
    %v676 = vpack.c.b16 %v628, %v624
    %v677 = vpack.c.b16 %v629, %v625
    %v678 = vpack.c.b16 %v634, %v630
    %v679 = vpack.c.b16 %v635, %v631
    %v680 = vpack.c.b16 %v636, %v632
    %v681 = vpack.c.b16 %v637, %v633
    %v682 = vpack.c.b16 %v642, %v638
    %v683 = vpack.c.b16 %v643, %v639
    %v684 = vpack.c.b16 %v644, %v640
    %v685 = vpack.c.b16 %v645, %v641
    %v686 = vpack.c.b16 %v650, %v646
    %v687 = vpack.c.b16 %v651, %v647
    %v688 = vpack.c.b16 %v652, %v648
    %v689 = vpack.c.b16 %v653, %v649
    %v690 = vpack.c.b16 %v658, %v654
    %v691 = vpack.c.b16 %v659, %v655
    %v692 = vpack.c.b16 %v660, %v656
    %v693 = vpack.c.b16 %v661, %v657
    %726 = vmatprep.subr.bf16.mxu0 %v663
    %727 = vmatpush1.bf16.msra.mxu0 %v662
    %728 = vmatprep.subr.bf16.mxu0 %v667
    %729 = vmatpush1.bf16.msra.mxu0 %v666
    %730 = vmatprep.subr.bf16.mxu0 %v671
    %731 = vmatpush1.bf16.msra.mxu0 %v670
    %732 = vmatprep.subr.bf16.mxu0 %v675
    %733 = vmatpush1.bf16.msra.mxu0 %v674
    %734 = vmatprep.subr.bf16.mxu0 %v679
    %735 = vmatpush1.bf16.msra.mxu0 %v678
    %736 = vmatprep.subr.bf16.mxu0 %v683
    %737 = vmatpush1.bf16.msra.mxu0 %v682
    %738 = vmatprep.subr.bf16.mxu0 %v687
    %739 = vmatpush1.bf16.msra.mxu0 %v686
    %740 = vmatprep.subr.bf16.mxu0 %v691
    %741 = vmatpush1.bf16.msra.mxu0 %v690
    %742 = vmatprep.subr.bf16.mxu0 0
    %743 = vmatpush1.bf16.msra.mxu0 0
    %744 = vmatprep.subr.bf16.mxu0 0
    %745 = vmatpush1.bf16.msra.mxu0 0
    %746 = vmatprep.subr.bf16.mxu0 0
    %747 = vmatpush1.bf16.msra.mxu0 0
    %748 = vmatprep.subr.bf16.mxu0 0
    %749 = vmatpush1.bf16.msra.mxu0 0
    %750 = vmatprep.subr.bf16.mxu0 0
    %751 = vmatpush1.bf16.msra.mxu0 0
    %752 = vmatprep.subr.bf16.mxu0 0
    %753 = vmatpush1.bf16.msra.mxu0 0
    %754 = vmatprep.subr.bf16.mxu0 0
    %755 = vmatpush1.bf16.msra.mxu0 0
    %756 = vmatprep.subr.bf16.mxu0 0
    %757 = vmatpush1.bf16.msra.mxu0 0
    %758 = vmatprep.mubr.bf16.mxu0 0
    %759 = vmatmul.mubr.bf16.gmra.mrb[0].mxu0 %v511
    %v760 = vpop.f32.mrb[0].mxu0
    %v761 = vadd.f32 %v549, %v760
    %v762 = vpop.f32.mrb[0].mxu0
    %v763 = vadd.f32 %v553, %v762
    %v764 = vpop.f32.mrb[0].mxu0
    %v765 = vadd.f32 %v549, %v764
    %v766 = vpop.f32.mrb[0].mxu0
    %v767 = vadd.f32 %v553, %v766
    %768 = vdwg.mxu0
    %769 = vmatprep.subr.bf16.mxu0 %v665
    %770 = vmatpush1.bf16.msra.mxu0 %v664
    %771 = vmatprep.subr.bf16.mxu0 %v669
    %772 = vmatpush1.bf16.msra.mxu0 %v668
    %773 = vmatprep.subr.bf16.mxu0 %v673
    %774 = vmatpush1.bf16.msra.mxu0 %v672
    %775 = vmatprep.subr.bf16.mxu0 %v677
    %776 = vmatpush1.bf16.msra.mxu0 %v676
    %777 = vmatprep.subr.bf16.mxu0 %v681
    %778 = vmatpush1.bf16.msra.mxu0 %v680
    %779 = vmatprep.subr.bf16.mxu0 %v685
    %780 = vmatpush1.bf16.msra.mxu0 %v684
    %781 = vmatprep.subr.bf16.mxu0 %v689
    %782 = vmatpush1.bf16.msra.mxu0 %v688
    %783 = vmatprep.subr.bf16.mxu0 %v693
    %784 = vmatpush1.bf16.msra.mxu0 %v692
    %785 = vmatprep.subr.bf16.mxu0 0
    %786 = vmatpush1.bf16.msra.mxu0 0
    %787 = vmatprep.subr.bf16.mxu0 0
    %788 = vmatpush1.bf16.msra.mxu0 0
    %789 = vmatprep.subr.bf16.mxu0 0
    %790 = vmatpush1.bf16.msra.mxu0 0
    %791 = vmatprep.subr.bf16.mxu0 0
    %792 = vmatpush1.bf16.msra.mxu0 0
    %793 = vmatprep.subr.bf16.mxu0 0
    %794 = vmatpush1.bf16.msra.mxu0 0
    %795 = vmatprep.subr.bf16.mxu0 0
    %796 = vmatpush1.bf16.msra.mxu0 0
    %797 = vmatprep.subr.bf16.mxu0 0
    %798 = vmatpush1.bf16.msra.mxu0 0
    %799 = vmatprep.subr.bf16.mxu0 0
    %800 = vmatpush1.bf16.msra.mxu0 0
    %801 = vmatprep.mubr.bf16.mxu0 0
    %802 = vmatmul.mubr.bf16.gmra.mrb[0].mxu0 %v511
    %v803 = vpop.f32.mrb[0].mxu0
    %v804 = vadd.f32 %v557, %v803
    %v805 = vpop.f32.mrb[0].mxu0
    %v806 = vadd.f32 %v561, %v805
    %v807 = vpop.f32.mrb[0].mxu0
    %v808 = vadd.f32 %v557, %v807
    %v809 = vpop.f32.mrb[0].mxu0
    %v810 = vadd.f32 %v561, %v809
    %811 = vdwg.mxu0
    %812 = vst [vmem:[%s11] sm:$0xff] %v761
    %813 = vst [vmem:[%s11 + $0x8] sm:$0xff] %v763
    %814 = vst [vmem:[%s11 + $0x10] sm:$0xff] %v804
    %815 = vst [vmem:[%s11 + $0x18] sm:$0xff] %v806
    %816 = vst [vmem:[%s11 + $0x20] sm:$0xff] %v765
    %817 = vst [vmem:[%s11 + $0x28] sm:$0xff] %v767
    %818 = vst [vmem:[%s11 + $0x30] sm:$0xff] %v808
    %819 = vst [vmem:[%s11 + $0x38] sm:$0xff] %v810
    %v820 = vlaneseq
    %v821 = vand.u32 %v820, 127
    %822 = vmax.xlane.f32.xlu0 %v761
    %v823 = vpop.xlane.xlu0 %822
    %824 = vmax.xlane.f32.xlu0 %v765
    %v825 = vpop.xlane.xlu0 %824
    %v826 = vsub.f32 %v761, %v823
    %v827 = vsub.f32 %v765, %v825
    %v828 = vmul.f32 %v826, 1.442695
    %v829 = vpow.pop %v828
    %v830 = vmul.f32 %v827, 1.442695
    %v831 = vpow.pop %v830
    %832 = vadd.xlane.f32.xlu0 %v829
    %v833 = vpop.xlane.xlu0 %832
    %834 = vadd.xlane.f32.xlu0 %v831
    %v835 = vpop.xlane.xlu0 %834
    %vm836 = vcmp.eq.s32.totalorder %v821, 0
    %v837 = vlog2.pop %v833
    %v838 = vmul.f32 %v837, 0.6931472
    %v839 = vlog2.pop %v835
    %v840 = vmul.f32 %v839, 0.6931472
    %v841 = vadd.f32 %v823, %v838
    %v842 = vadd.f32 %v825, %v840
    %v843 = vsel %vm836, %v841, 0.0
    %v844 = vsel %vm836, %v842, 0.0
    %v845 = vrcp.pop %v833
    %v846 = vrcp.pop %v835
    %v847 = vmul.f32 %v829, %v845
    %v848 = vmul.f32 %v831, %v846
    %v849 = vadd.f32 %v847, 0.0
    %v850 = vadd.f32 %v848, 0.0
    %851 = vmax.xlane.f32.xlu0 %v763
    %v852 = vpop.xlane.xlu0 %851
    %853 = vmax.xlane.f32.xlu0 %v767
    %v854 = vpop.xlane.xlu0 %853
    %v855 = vsub.f32 %v763, %v852
    %v856 = vsub.f32 %v767, %v854
    %v857 = vmul.f32 %v855, 1.442695
    %v858 = vpow.pop %v857
    %v859 = vmul.f32 %v856, 1.442695
    %v860 = vpow.pop %v859
    %861 = vadd.xlane.f32.xlu0 %v858
    %v862 = vpop.xlane.xlu0 %861
    %863 = vadd.xlane.f32.xlu0 %v860
    %v864 = vpop.xlane.xlu0 %863
    %vm865 = vcmp.eq.s32.totalorder %v821, 1
    %v866 = vlog2.pop %v862
    %v867 = vmul.f32 %v866, 0.6931472
    %v868 = vlog2.pop %v864
    %v869 = vmul.f32 %v868, 0.6931472
    %v870 = vadd.f32 %v852, %v867
    %v871 = vadd.f32 %v854, %v869
    %v872 = vsel %vm865, %v870, %v843
    %v873 = vsel %vm865, %v871, %v844
    %v874 = vrcp.pop %v862
    %v875 = vrcp.pop %v864
    %v876 = vmul.f32 %v858, %v874
    %v877 = vmul.f32 %v860, %v875
    %v878 = vadd.f32 %v849, %v876
    %v879 = vadd.f32 %v850, %v877
    %880 = vmax.xlane.f32.xlu0 %v804
    %v881 = vpop.xlane.xlu0 %880
    %882 = vmax.xlane.f32.xlu0 %v808
    %v883 = vpop.xlane.xlu0 %882
    %v884 = vsub.f32 %v804, %v881
    %v885 = vsub.f32 %v808, %v883
    %v886 = vmul.f32 %v884, 1.442695
    %v887 = vpow.pop %v886
    %v888 = vmul.f32 %v885, 1.442695
    %v889 = vpow.pop %v888
    %890 = vadd.xlane.f32.xlu0 %v887
    %v891 = vpop.xlane.xlu0 %890
    %892 = vadd.xlane.f32.xlu0 %v889
    %v893 = vpop.xlane.xlu0 %892
    %vm894 = vcmp.eq.s32.totalorder %v821, 2
    %v895 = vlog2.pop %v891
    %v896 = vmul.f32 %v895, 0.6931472
    %v897 = vlog2.pop %v893
    %v898 = vmul.f32 %v897, 0.6931472
    %v899 = vadd.f32 %v881, %v896
    %v900 = vadd.f32 %v883, %v898
    %v901 = vsel %vm894, %v899, %v872
    %v902 = vsel %vm894, %v900, %v873
    %v903 = vrcp.pop %v891
    %v904 = vrcp.pop %v893
    %v905 = vmul.f32 %v887, %v903
    %v906 = vmul.f32 %v889, %v904
    %v907 = vadd.f32 %v878, %v905
    %v908 = vadd.f32 %v879, %v906
    %909 = vmax.xlane.f32.xlu0 %v806
    %v910 = vpop.xlane.xlu0 %909
    %911 = vmax.xlane.f32.xlu0 %v810
    %v912 = vpop.xlane.xlu0 %911
    %v913 = vsub.f32 %v806, %v910
    %v914 = vsub.f32 %v810, %v912
    %v915 = vmul.f32 %v913, 1.442695
    %v916 = vpow.pop %v915
    %v917 = vmul.f32 %v914, 1.442695
    %v918 = vpow.pop %v917
    %919 = vadd.xlane.f32.xlu0 %v916
    %v920 = vpop.xlane.xlu0 %919
    %921 = vadd.xlane.f32.xlu0 %v918
    %v922 = vpop.xlane.xlu0 %921
    %vm923 = vcmp.eq.s32.totalorder %v821, 3
    %v924 = vlog2.pop %v920
    %v925 = vmul.f32 %v924, 0.6931472
    %v926 = vlog2.pop %v922
    %v927 = vmul.f32 %v926, 0.6931472
    %v928 = vadd.f32 %v910, %v925
    %v929 = vadd.f32 %v912, %v927
    %v930 = vsel %vm923, %v928, %v901
    %v931 = vsel %vm923, %v929, %v902
    %v932 = vrcp.pop %v920
    %v933 = vrcp.pop %v922
    %v934 = vmul.f32 %v916, %v932
    %v935 = vmul.f32 %v918, %v933
    %v936 = vadd.f32 %v907, %v934
    %v937 = vadd.f32 %v908, %v935
    %vm938 = vcmask 31744
    %939 = vst.msk [vmem:[%s12] sm:$0xff] %vm938, %v930
    %940 = vst.msk [vmem:[%s12 + $0x8] sm:$0xff] %vm938, %v931
    %v941 = vlog2.pop %v936
    %v942 = vmul.f32 %v941, 0.6931472
    %v943 = vlog2.pop %v937
    %v944 = vmul.f32 %v943, 0.6931472
    %945 = vst [vmem:[#allocation2] sm:$0xff] %v942
    %946 = vst [vmem:[#allocation2 + $0x8] sm:$0xff] %v944
    // Predicated region
    $region46: #{recognition_head_forward.1} parent=1 // pred_check
      _
    $region47: #{recognition_head_forward.1} parent=1 // pred_check_branch
      %948 = sbr.rel (0) target = $region49
    $region48: #{recognition_head_forward.1} parent=1 // pred_region
      _
    $region49: #{recognition_head_forward.1} parent=1 // pred_fallthru
      _
    // Predicated region
    $region50: #{recognition_head_forward.1} parent=1 // pred_check
      _
    $region51: #{recognition_head_forward.1} parent=1 // pred_check_branch
      %950 = sbr.rel (0) target = $region53
    $region52: #{recognition_head_forward.1} parent=1 // pred_region
      _
    $region53: #{recognition_head_forward.1} parent=1 // pred_fallthru
      _
    // Predicated region
    $region54: #{recognition_head_forward.1} parent=1 // pred_check
      _
    $region55: #{recognition_head_forward.1} parent=1 // pred_check_branch
      %952 = sbr.rel (0) target = $region57
    $region56: #{recognition_head_forward.1} parent=1 // pred_region
      %s954 = ssub.s32 256, 256
      %955 = vsyncadd [#allocation3], %s954
      %s956 = sshll.u32 [#allocation2], 4
      %s957 = int_to_ptr.vmem [resolvable:$true] %s956
      %962 = dma.vmem_to_hbm [thread:$0]  %s957, 256, %s13, [#allocation3], 128, 128, 8
    $region57: #{recognition_head_forward.1} parent=1 // pred_fallthru
      _
    // Predicated region
    $region58: #{recognition_head_forward.1} parent=1 // pred_check
      _
    $region59: #{recognition_head_forward.1} parent=1 // pred_check_branch
      %964 = sbr.rel (0) target = $region61
    $region60: #{recognition_head_forward.1} parent=1 // pred_region
      _
    $region61: #{recognition_head_forward.1} parent=1 // pred_fallthru
      _
    // Predicated region
    $region62: #{recognition_head_forward.1} parent=1 // pred_check
      _
    $region63: #{recognition_head_forward.1} parent=1 // pred_check_branch
      %966 = sbr.rel (0) target = $region65
    $region64: #{recognition_head_forward.1} parent=1 // pred_region
      _
    $region65: #{recognition_head_forward.1} parent=1 // pred_fallthru
      _
    // Predicated region
    $region66: #{recognition_head_forward.1} parent=1 // pred_check
      _
    $region67: #{recognition_head_forward.1} parent=1 // pred_check_branch
      %968 = sbr.rel (0) target = $region69
    $region68: #{recognition_head_forward.1} parent=1 // pred_region
      %969 = dma.done [#allocation3], 256
    $region69: #{recognition_head_forward.1} parent=1 // pred_fallthru
      _
    %970 = vsyncpa [#allocation3], 1

</llo_original>
